<compile_context>
chip_gen: v5e
topology: v5e:2x2
jax: 0.10.0
libtpu: 0.0.40
codegen_flags: <defaults>
</compile_context>

<pallas_src>
import functools

import jax
import jax.numpy as jnp
from jax.experimental import pallas as pl
from jax.experimental.pallas import tpu as pltpu

KH, KW = 2, 2  # Conv2d kernel size


def _conv_bn_kernel(params_ref, x_ref, o_ref, *, H, W):
    """2x2 valid conv (1->1 channel) with BN pre-folded, NCHW-flattened layout.

    params_ref : SMEM (5,) f32 = [w00, w01, w10, w11, bias]  (BN already folded)
    x_ref      : VMEM (Nb, H*W)    batch on sublanes, flattened spatial on lanes
    o_ref      : VMEM (Nb, Ho*Wo)  NCHW-flattened output block
    """
    Ho, Wo = H - KH + 1, W - KW + 1
    HW, HWO = H * W, Ho * Wo

    w00 = params_ref[0]
    w01 = params_ref[1]
    w10 = params_ref[2]
    w11 = params_ref[3]
    bias = params_ref[4]

    x = x_ref[...]  # (Nb, H*W)

    # The four 2x2 taps as lane rotations (XLU; rolls wrap only into lanes that
    # are never selected below, so wrap-around values are harmless).
    x01 = pltpu.roll(x, shift=HW - 1, axis=1)        # x[n, r + 1]
    x10 = pltpu.roll(x, shift=HW - W, axis=1)        # x[n, r + W]
    x11 = pltpu.roll(x, shift=HW - W - 1, axis=1)    # x[n, r + W + 1]

    # Conv + folded BN; valid at lanes r = h*W + w with h < Ho, w < Wo.
    y = w00 * x + w01 * x01 + w10 * x10 + w11 * x11 + bias

    # Compact lanes h*W + w  ->  h*Wo + w (the NCHW-flattened output index)
    # with masked rolls: piece h lives at [h*W, h*W + Wo) and is shifted left
    # by h so it lands at [h*Wo, (h+1)*Wo).  Pieces are disjoint; exact f32.
    lane = jax.lax.broadcasted_iota(jnp.int32, y.shape, 1)
    acc = jnp.where(lane < Wo, y, 0.0)               # h = 0 is already in place
    for h in range(1, Ho):
        piece = jnp.where((lane >= h * W) & (lane < h * W + Wo), y, 0.0)
        acc = acc + pltpu.roll(piece, shift=HW - h, axis=1)

    o_ref[...] = acc[:, :HWO]


def _num_tensorcores():
    """Best-effort TensorCores-per-device (for megacore grid sharding)."""
    try:
        kind = jax.devices()[0].device_kind.lower()
    except Exception:
        return 2
    # Single-TC chips: v5e / v6e ("lite" / trillium).  v4 / v5p / v7x expose 2.
    if ("lite" in kind) or ("v5e" in kind) or ("v6e" in kind) or ("trillium" in kind):
        return 1
    return 2


def _pick_batch_tile(N, hw, hwo, n_tc):
    """Batch rows per grid step.  Generation-aware (review items 4-7)."""
    # VMEM bytes per batch row for the in+out pipeline buffers ((8,128) f32 tiles).
    bytes_per_row = (pl.cdiv(hw, 128) + pl.cdiv(hwo, 128)) * 512
    stage_budget = 4 << 20  # ~4 MiB of in+out VMEM per pipeline stage
    nb = max(8, (stage_budget // bytes_per_row) // 8 * 8)
    if n_tc >= 2 and N >= 16 * n_tc:
        # >= 2 grid steps per TensorCore so each core overlaps DMA with compute.
        cap = max(8, pl.cdiv(pl.cdiv(N, 2 * n_tc), 8) * 8)
        nb = min(nb, cap)
    if nb >= N:
        return N  # single block covering the whole batch (single-TC small case)
    return nb


def conv_bn_forward(x_nchw, conv_w, conv_b, gamma, beta, r_mean, r_var, eps=1e-5):
    """x_nchw: (N, 1, H, W) f32. Returns (N, 1, H-1, W-1) f32."""
    N, C, H, W = x_nchw.shape
    assert C == 1
    Ho, Wo = H - KH + 1, W - KW + 1
    HW, HWO = H * W, Ho * Wo

    # Fold eval-mode BN into the conv weights (O(1) scalar constant folding).
    # TODO(synk): training-mode BN (batch-statistics update) is not implemented;
    # the fuse_conv_bn pattern implies eval-mode BN.
    gamma = jnp.asarray(gamma, jnp.float32)
    beta = jnp.asarray(beta, jnp.float32)
    r_mean = jnp.asarray(r_mean, jnp.float32)
    r_var = jnp.asarray(r_var, jnp.float32)
    scale = gamma / jnp.sqrt(r_var + jnp.float32(eps))
    w_f = conv_w.reshape(KH * KW).astype(jnp.float32) * scale               # (4,)
    b_f = (conv_b.reshape(()).astype(jnp.float32) - r_mean) * scale + beta  # ()
    params = jnp.concatenate([w_f, b_f.reshape(1)])                         # (5,)

    # Free contiguous reshape (no HBM transpose / pad / slice anywhere).
    x2d = x_nchw.reshape(N, HW)

    n_tc = _num_tensorcores()
    nb = _pick_batch_tile(N, HW, HWO, n_tc)
    grid = (pl.cdiv(N, nb),)

    kernel = functools.partial(_conv_bn_kernel, H=H, W=W)

    out2d = pl.pallas_call(
        kernel,
        out_shape=jax.ShapeDtypeStruct((N, HWO), jnp.float32),
        grid_spec=pltpu.PrefetchScalarGridSpec(
            num_scalar_prefetch=0,
            grid=grid,
            in_specs=[
                pl.BlockSpec(memory_space=pltpu.MemorySpace.SMEM),  # folded params
                pl.BlockSpec((nb, HW), lambda n: (n, 0)),           # NCHW-flat input
            ],
            out_specs=pl.BlockSpec((nb, HWO), lambda n: (n, 0)),    # NCHW-flat output
        ),
        compiler_params=pltpu.CompilerParams(
            dimension_semantics=("parallel",),       # batch blocks over the TCs
            vmem_limit_bytes=48 * 1024 * 1024,       # headroom for buffers + temps
        ),
    )(params, x2d)

    # Free reshape back to NCHW.
    return out2d.reshape(N, 1, Ho, Wo)


def reference(x_nchw, conv_w, conv_b, gamma, beta, r_mean, r_var, eps=1e-5):
    y = jax.lax.conv_general_dilated(
        x_nchw, conv_w, window_strides=(1, 1), padding="VALID",
        dimension_numbers=("NCHW", "OIHW", "NCHW"),
        precision=jax.lax.Precision.HIGHEST)
    y = y + conv_b.reshape(1, -1, 1, 1)
    y = (y - r_mean) / jnp.sqrt(r_var + eps) * gamma + beta
    return y


if __name__ == "__main__":
    key = jax.random.PRNGKey(0)
    k_x, k_w, k_b = jax.random.split(key, 3)

    # Small but lane-friendly demo: H*W = 128 so every load/compute vreg is a
    # dense 128-lane vreg; batch sits on sublanes / the grid axis.
    N, C, H, W = 256, 1, 8, 16
    x = jax.random.normal(k_x, (N, C, H, W), dtype=jnp.float32)

    # Deterministic Conv2d init (kaiming-uniform-like bound = 1/sqrt(fan_in)).
    fan_in = C * KH * KW
    bound = 1.0 / (fan_in ** 0.5)
    conv_w = jax.random.uniform(k_w, (1, 1, KH, KW), jnp.float32, -bound, bound)
    conv_b = jax.random.uniform(k_b, (1,), jnp.float32, -bound, bound)

    # BatchNorm2d(1, affine=True) fresh init, eval-mode statistics.
    gamma, beta = 1.0, 0.0
    r_mean, r_var = 0.0, 1.0
    eps = 1e-5

    fwd = jax.jit(conv_bn_forward)
    out = jax.block_until_ready(fwd(x, conv_w, conv_b, gamma, beta, r_mean, r_var, eps))

    ref = reference(x, conv_w, conv_b, gamma, beta, r_mean, r_var, eps)
    assert out.shape == (N, 1, H - 1, W - 1), out.shape
    assert jnp.allclose(out, ref, atol=1e-5, rtol=1e-5), \
        float(jnp.max(jnp.abs(out - ref)))

    print("KERNEL_OK")
</pallas_src>

<mosaic_0001>
module attributes {stable_mosaic.version = 11 : i64} {
  func.func @_conv_bn_kernel(%arg0: i32, %arg1: memref<5xf32, #tpu.memory_space<smem>>, %arg2: memref<64x128xf32, #tpu.memory_space<vmem>>, %arg3: memref<64x105xf32, #tpu.memory_space<vmem>>) attributes {dimension_semantics = [#tpu.dimension_semantics<parallel>], iteration_bounds = array<i64: 4>, scalar_prefetch = 0 : i64, scratch_operands = 0 : i64, tpu.core_type = #tpu.core_type<tc>, window_params = [{transform_indices = @transform_0, window_bounds = array<i64: 5>}, {transform_indices = @transform_1, window_bounds = array<i64: 64, 128>}, {transform_indices = @transform_2, window_bounds = array<i64: 64, 105>}]} {
    %c0 = arith.constant 0 : index
    %0 = memref.load %arg1[%c0] : memref<5xf32, #tpu.memory_space<smem>>
    %c1 = arith.constant 1 : index
    %1 = memref.load %arg1[%c1] : memref<5xf32, #tpu.memory_space<smem>>
    %c2 = arith.constant 2 : index
    %2 = memref.load %arg1[%c2] : memref<5xf32, #tpu.memory_space<smem>>
    %c3 = arith.constant 3 : index
    %3 = memref.load %arg1[%c3] : memref<5xf32, #tpu.memory_space<smem>>
    %c4 = arith.constant 4 : index
    %4 = memref.load %arg1[%c4] : memref<5xf32, #tpu.memory_space<smem>>
    %c0_0 = arith.constant 0 : index
    %c0_1 = arith.constant 0 : index
    %5 = vector.load %arg2[%c0_0, %c0_1] : memref<64x128xf32, #tpu.memory_space<vmem>>, vector<64x128xf32>
    %c127_i32 = arith.constant 127 : i32
    %6 = tpu.dynamic_rotate %5 by %c127_i32 dim 1 : vector<64x128xf32>, i32 -> vector<64x128xf32>
    %c112_i32 = arith.constant 112 : i32
    %7 = tpu.dynamic_rotate %5 by %c112_i32 dim 1 : vector<64x128xf32>, i32 -> vector<64x128xf32>
    %c111_i32 = arith.constant 111 : i32
    %8 = tpu.dynamic_rotate %5 by %c111_i32 dim 1 : vector<64x128xf32>, i32 -> vector<64x128xf32>
    %9 = vector.broadcast %0 : f32 to vector<64x128xf32>
    %10 = arith.mulf %9, %5 : vector<64x128xf32>
    %11 = vector.broadcast %1 : f32 to vector<64x128xf32>
    %12 = arith.mulf %11, %6 : vector<64x128xf32>
    %13 = arith.addf %10, %12 : vector<64x128xf32>
    %14 = vector.broadcast %2 : f32 to vector<64x128xf32>
    %15 = arith.mulf %14, %7 : vector<64x128xf32>
    %16 = arith.addf %13, %15 : vector<64x128xf32>
    %17 = vector.broadcast %3 : f32 to vector<64x128xf32>
    %18 = arith.mulf %17, %8 : vector<64x128xf32>
    %19 = arith.addf %16, %18 : vector<64x128xf32>
    %20 = vector.broadcast %4 : f32 to vector<64x128xf32>
    %21 = arith.addf %19, %20 : vector<64x128xf32>
    %22 = tpu.iota {dimensions = array<i32: 1>} : vector<64x128xi32>
    %c15_i32 = arith.constant 15 : i32
    %23 = vector.broadcast %c15_i32 : i32 to vector<64x128xi32>
    %24 = arith.cmpi slt, %22, %23 : vector<64x128xi32>
    %cst = arith.constant 0.000000e+00 : f32
    %25 = vector.broadcast %cst : f32 to vector<64x128xf32>
    %26 = arith.select %24, %21, %25 : vector<64x128xi1>, vector<64x128xf32>
    %c16_i32 = arith.constant 16 : i32
    %27 = vector.broadcast %c16_i32 : i32 to vector<64x128xi32>
    %28 = arith.cmpi sge, %22, %27 : vector<64x128xi32>
    %c31_i32 = arith.constant 31 : i32
    %29 = vector.broadcast %c31_i32 : i32 to vector<64x128xi32>
    %30 = arith.cmpi slt, %22, %29 : vector<64x128xi32>
    %31 = arith.andi %28, %30 : vector<64x128xi1>
    %cst_2 = arith.constant 0.000000e+00 : f32
    %32 = vector.broadcast %cst_2 : f32 to vector<64x128xf32>
    %33 = arith.select %31, %21, %32 : vector<64x128xi1>, vector<64x128xf32>
    %c127_i32_3 = arith.constant 127 : i32
    %34 = tpu.dynamic_rotate %33 by %c127_i32_3 dim 1 : vector<64x128xf32>, i32 -> vector<64x128xf32>
    %35 = arith.addf %26, %34 : vector<64x128xf32>
    %c32_i32 = arith.constant 32 : i32
    %36 = vector.broadcast %c32_i32 : i32 to vector<64x128xi32>
    %37 = arith.cmpi sge, %22, %36 : vector<64x128xi32>
    %c47_i32 = arith.constant 47 : i32
    %38 = vector.broadcast %c47_i32 : i32 to vector<64x128xi32>
    %39 = arith.cmpi slt, %22, %38 : vector<64x128xi32>
    %40 = arith.andi %37, %39 : vector<64x128xi1>
    %cst_4 = arith.constant 0.000000e+00 : f32
    %41 = vector.broadcast %cst_4 : f32 to vector<64x128xf32>
    %42 = arith.select %40, %21, %41 : vector<64x128xi1>, vector<64x128xf32>
    %c126_i32 = arith.constant 126 : i32
    %43 = tpu.dynamic_rotate %42 by %c126_i32 dim 1 : vector<64x128xf32>, i32 -> vector<64x128xf32>
    %44 = arith.addf %35, %43 : vector<64x128xf32>
    %c48_i32 = arith.constant 48 : i32
    %45 = vector.broadcast %c48_i32 : i32 to vector<64x128xi32>
    %46 = arith.cmpi sge, %22, %45 : vector<64x128xi32>
    %c63_i32 = arith.constant 63 : i32
    %47 = vector.broadcast %c63_i32 : i32 to vector<64x128xi32>
    %48 = arith.cmpi slt, %22, %47 : vector<64x128xi32>
    %49 = arith.andi %46, %48 : vector<64x128xi1>
    %cst_5 = arith.constant 0.000000e+00 : f32
    %50 = vector.broadcast %cst_5 : f32 to vector<64x128xf32>
    %51 = arith.select %49, %21, %50 : vector<64x128xi1>, vector<64x128xf32>
    %c125_i32 = arith.constant 125 : i32
    %52 = tpu.dynamic_rotate %51 by %c125_i32 dim 1 : vector<64x128xf32>, i32 -> vector<64x128xf32>
    %53 = arith.addf %44, %52 : vector<64x128xf32>
    %c64_i32 = arith.constant 64 : i32
    %54 = vector.broadcast %c64_i32 : i32 to vector<64x128xi32>
    %55 = arith.cmpi sge, %22, %54 : vector<64x128xi32>
    %c79_i32 = arith.constant 79 : i32
    %56 = vector.broadcast %c79_i32 : i32 to vector<64x128xi32>
    %57 = arith.cmpi slt, %22, %56 : vector<64x128xi32>
    %58 = arith.andi %55, %57 : vector<64x128xi1>
    %cst_6 = arith.constant 0.000000e+00 : f32
    %59 = vector.broadcast %cst_6 : f32 to vector<64x128xf32>
    %60 = arith.select %58, %21, %59 : vector<64x128xi1>, vector<64x128xf32>
    %c124_i32 = arith.constant 124 : i32
    %61 = tpu.dynamic_rotate %60 by %c124_i32 dim 1 : vector<64x128xf32>, i32 -> vector<64x128xf32>
    %62 = arith.addf %53, %61 : vector<64x128xf32>
    %c80_i32 = arith.constant 80 : i32
    %63 = vector.broadcast %c80_i32 : i32 to vector<64x128xi32>
    %64 = arith.cmpi sge, %22, %63 : vector<64x128xi32>
    %c95_i32 = arith.constant 95 : i32
    %65 = vector.broadcast %c95_i32 : i32 to vector<64x128xi32>
    %66 = arith.cmpi slt, %22, %65 : vector<64x128xi32>
    %67 = arith.andi %64, %66 : vector<64x128xi1>
    %cst_7 = arith.constant 0.000000e+00 : f32
    %68 = vector.broadcast %cst_7 : f32 to vector<64x128xf32>
    %69 = arith.select %67, %21, %68 : vector<64x128xi1>, vector<64x128xf32>
    %c123_i32 = arith.constant 123 : i32
    %70 = tpu.dynamic_rotate %69 by %c123_i32 dim 1 : vector<64x128xf32>, i32 -> vector<64x128xf32>
    %71 = arith.addf %62, %70 : vector<64x128xf32>
    %c96_i32 = arith.constant 96 : i32
    %72 = vector.broadcast %c96_i32 : i32 to vector<64x128xi32>
    %73 = arith.cmpi sge, %22, %72 : vector<64x128xi32>
    %c111_i32_8 = arith.constant 111 : i32
    %74 = vector.broadcast %c111_i32_8 : i32 to vector<64x128xi32>
    %75 = arith.cmpi slt, %22, %74 : vector<64x128xi32>
    %76 = arith.andi %73, %75 : vector<64x128xi1>
    %cst_9 = arith.constant 0.000000e+00 : f32
    %77 = vector.broadcast %cst_9 : f32 to vector<64x128xf32>
    %78 = arith.select %76, %21, %77 : vector<64x128xi1>, vector<64x128xf32>
    %c122_i32 = arith.constant 122 : i32
    %79 = tpu.dynamic_rotate %78 by %c122_i32 dim 1 : vector<64x128xf32>, i32 -> vector<64x128xf32>
    %80 = arith.addf %71, %79 : vector<64x128xf32>
    %81 = vector.extract_strided_slice %80 {offsets = [0, 0], sizes = [64, 105], strides = [1, 1]} : vector<64x128xf32> to vector<64x105xf32>
    %c0_10 = arith.constant 0 : index
    %c0_11 = arith.constant 0 : index
    %82 = vector.load %arg3[%c0_10, %c0_11] : memref<64x105xf32, #tpu.memory_space<vmem>>, vector<64x105xf32>
    tpu.vector_store %arg3[%c0_10, %c0_11], %81 {strides = array<i32>} : memref<64x105xf32, #tpu.memory_space<vmem>>, vector<64x105xf32>,
    return
  }
  func.func @transform_0(%arg0: i32) -> i32 {
    %c0_i32 = arith.constant 0 : i32
    %c0_i32_0 = arith.constant 0 : i32
    return %c0_i32 : i32
  }
  func.func @transform_1(%arg0: i32) -> (i32, i32) {
    %c0_i32 = arith.constant 0 : i32
    %c0_i32_0 = arith.constant 0 : i32
    return %arg0, %c0_i32 : i32, i32
  }
  func.func @transform_2(%arg0: i32) -> (i32, i32) {
    %c0_i32 = arith.constant 0 : i32
    %c0_i32_0 = arith.constant 0 : i32
    return %arg0, %c0_i32 : i32, i32
  }
}

</mosaic_0001>

<llo_original>
// kernel: conv_bn_forward.1
$region0: #{conv_bn_forward.1}
  #allocation0 [shape = 'u32[]', space=smem, size = 0x4, offset = 0x4, fixed_abs, tag = 'smem constant byte address 0x4 - core index']
  #allocation1 [shape = 'u32[72,128]{1,0:T(1,128)}', space=vmem, size = 0x9000, scoped, tag = 'internal scratch']
  %s0 = inlined_call_operand.vmem [shape: f32[5], index: 0, kind: input, shape index: {}]
  %s1 = inlined_call_operand.vmem [shape: f32[256,128], index: 1, kind: input, shape index: {}]
  %s2 = inlined_call_operand.vmem [shape: f32[256,105], index: 2, kind: output, shape index: {}]
  %s3 = sld [smem:[#allocation0]]
  $region45: #{conv_bn_forward.1} parent=0
    _
  %s5 = ssub.s32 1, %s3
  %s6 = scalar_select 0, %s5, %s3
  $region1: #{conv_bn_forward.1} parent=0
    #allocation2 [shape = 'u8[512]{0}', space=smem, size = 0x200, scoped, tag = 'input window, operand 0, single buffered']
    #allocation3 [shape = 's32[2]{0}', space=sflag, size = 0x8, scoped, tag = 'scoped memory for conv_bn_forward.1']
    %7 = vsyncpa [#allocation3], 0
    loop: start=0, step=1, limit=6
    $region2: #{conv_bn_forward.1} parent=1 // loop_pre_header
      _
    $region3: #{conv_bn_forward.1} parent=1 // loop_header
      %s9 = sphi 0, %s13
      %p10 = scmp.ge.s32.totalorder %s9, 6
      %s17 = sphi 0, %s17
      %s19 = sphi 0, %s17
      %s20 = sphi 0, %s19
      %s34 = sphi 0, %s20
      %s40 = sphi 0, %s42
      %s43 = sphi 0, %s40
      %s44 = sphi 0, %s43
      %s60 = sphi 0, %s44
      %s66 = sphi 0, %s68
      %s69 = sphi 0, %s66
      %s70 = sphi 0, %s69
      %s86 = sphi 0, %s70
    $region4: #{conv_bn_forward.1} parent=1 // loop_header_branch
      %12 = sbr.rel (%p10) target = $region8
    $region5: #{conv_bn_forward.1} parent=1 // loop_body
      %s14 = ssub.s32 %s9, 1
      %s15 = ssub.s32 %s9, 2
      %s16 = sadd.s32 %s9, 1
      %s18 = sadd.s32 %s17, 1
      %p21 = scmp.eq.s32.totalorder %s9, 3
      %p22 = scmp.ne.s32.totalorder %s17, %s19
      %p23 = scmp.eq.s32.totalorder %s9, 0
      %p24 = por %p22, %p23
      %p25 = scmp.ne.s32.totalorder %s17, %s19
      %p26 = scmp.eq.s32.totalorder %s14, 3
      %p27 = por %p25, %p26
      %p28 = scmp.ne.s32.totalorder %s19, %s20
      %p29 = scmp.eq.s32.totalorder %s14, 0
      %p30 = por %p28, %p29
      %p31 = scmp.ne.s32.totalorder %s19, %s20
      %p32 = scmp.eq.s32.totalorder %s15, 3
      %p33 = por %p31, %p32
      %p35 = scmp.ne.s32.totalorder %s20, %s34
      %p36 = scmp.eq.s32.totalorder %s15, 0
      %p37 = por %p35, %p36
      %s38 = ssub.s32 %s9, %s16
      %p39 = scmp.eq.s32.totalorder %s38, 0
      %s41 = sadd.s32 %s40, 1
      %s42 = scalar_select %p39, %s40, %s41
      %p45 = pneg %p39
      %p46 = scmp.eq.s32.totalorder %s9, 3
      %p47 = por %p45, %p46
      %p48 = scmp.ne.s32.totalorder %s40, %s43
      %p49 = scmp.eq.s32.totalorder %s9, 0
      %p50 = por %p48, %p49
      %p51 = scmp.ne.s32.totalorder %s40, %s43
      %p52 = scmp.eq.s32.totalorder %s14, 3
      %p53 = por %p51, %p52
      %p54 = scmp.ne.s32.totalorder %s43, %s44
      %p55 = scmp.eq.s32.totalorder %s14, 0
      %p56 = por %p54, %p55
      %p57 = scmp.ne.s32.totalorder %s43, %s44
      %p58 = scmp.eq.s32.totalorder %s15, 3
      %p59 = por %p57, %p58
      %p61 = scmp.ne.s32.totalorder %s44, %s60
      %p62 = scmp.eq.s32.totalorder %s15, 0
      %p63 = por %p61, %p62
      %s64 = ssub.s32 %s9, %s16
      %p65 = scmp.eq.s32.totalorder %s64, 0
      %s67 = sadd.s32 %s66, 1
      %s68 = scalar_select %p65, %s66, %s67
      %p71 = pneg %p65
      %p72 = scmp.eq.s32.totalorder %s9, 3
      %p73 = por %p71, %p72
      %p74 = scmp.ne.s32.totalorder %s66, %s69
      %p75 = scmp.eq.s32.totalorder %s9, 0
      %p76 = por %p74, %p75
      %p77 = scmp.ne.s32.totalorder %s66, %s69
      %p78 = scmp.eq.s32.totalorder %s14, 3
      %p79 = por %p77, %p78
      %p80 = scmp.ne.s32.totalorder %s69, %s70
      %p81 = scmp.eq.s32.totalorder %s14, 0
      %p82 = por %p80, %p81
      %p83 = scmp.ne.s32.totalorder %s69, %s70
      %p84 = scmp.eq.s32.totalorder %s15, 3
      %p85 = por %p83, %p84
      %p87 = scmp.ne.s32.totalorder %s70, %s86
      %p88 = scmp.eq.s32.totalorder %s15, 0
      %p89 = por %p87, %p88
      %p90 = scmp.le.s32.totalorder 1, %s9
      %p91 = scmp.lt.s32.totalorder %s9, 5
      %p92 = pnand %p90, %p91
      %p93 = pneg %p92
      // Predicated region
      $region9: #{conv_bn_forward.1} parent=5 // pred_check
        _
      $region10: #{conv_bn_forward.1} parent=5 // pred_check_branch
        %95 = sbr.rel (%p92) target = $region12
      $region11: #{conv_bn_forward.1} parent=5 // pred_region
        %s96 = ssub.s32 %s9, 1
        // Predicated region
        $region13: #{conv_bn_forward.1} parent=11 // pred_check
          %p97 = pneg %p30
        $region14: #{conv_bn_forward.1} parent=11 // pred_check_branch
          %99 = sbr.rel (%p97) target = $region16
        $region15: #{conv_bn_forward.1} parent=11 // pred_region
          %101 = vsyncadd [#allocation3], 0
          %s103 = sshll.u32 %s0, 4
          %s104 = int_to_ptr.vmem [resolvable:$true] %s103
          %106 = dma.vmem_to_smem %s104, 16, [#allocation2], [#allocation3]
        $region16: #{conv_bn_forward.1} parent=11 // pred_fallthru
          _
      $region12: #{conv_bn_forward.1} parent=5 // pred_fallthru
        _
      %p107 = scmp.lt.s32.totalorder %s9, 4
      // Predicated region
      $region17: #{conv_bn_forward.1} parent=5 // pred_check
        %p108 = pneg %p107
      $region18: #{conv_bn_forward.1} parent=5 // pred_check_branch
        %110 = sbr.rel (%p108) target = $region20
      $region19: #{conv_bn_forward.1} parent=5 // pred_region
        // Predicated region
        $region21: #{conv_bn_forward.1} parent=19 // pred_check
          %p111 = pneg %p50
        $region22: #{conv_bn_forward.1} parent=19 // pred_check_branch
          %113 = sbr.rel (%p111) target = $region24
        $region23: #{conv_bn_forward.1} parent=19 // pred_region
          %s114 = smul.u32 8, %s9
          %p115 = scmp.lt.s32.totalorder %s114, 31
          %s116 = scalar_select %p115, %s114, 31
          %s117 = smul.addr %s116, 8
          %s118 = scalar_lea.vmem %s1, %s117
          %s119 = smul.u32 8, %s9
        $region24: #{conv_bn_forward.1} parent=19 // pred_fallthru
          _
      $region20: #{conv_bn_forward.1} parent=5 // pred_fallthru
        _
      %p120 = scmp.le.s32.totalorder 1, %s9
      %p121 = scmp.lt.s32.totalorder %s9, 5
      %p122 = pnand %p120, %p121
      %p123 = pneg %p122
      // Predicated region
      $region25: #{conv_bn_forward.1} parent=5 // pred_check
        _
      $region26: #{conv_bn_forward.1} parent=5 // pred_check_branch
        %125 = sbr.rel (%p122) target = $region28
      $region27: #{conv_bn_forward.1} parent=5 // pred_region
        %s126 = ssub.s32 %s9, 1
        // Predicated region
        $region29: #{conv_bn_forward.1} parent=27 // pred_check
          %p127 = pneg %p30
        $region30: #{conv_bn_forward.1} parent=27 // pred_check_branch
          %129 = sbr.rel (%p127) target = $region32
        $region31: #{conv_bn_forward.1} parent=27 // pred_region
          %131 = dma.done [#allocation3], 16
        $region32: #{conv_bn_forward.1} parent=27 // pred_fallthru
          _
        %132 = sfence
        %p133 = pneg %p30
        %p134 = pneg %p27
        %s135 = smul.u32 8, %s14
        %p136 = scmp.lt.s32.totalorder %s135, 31
        %s137 = scalar_select %p136, %s135, 31
        %s138 = smul.addr %s137, 8
        %s139 = scalar_lea.vmem %s1, %s138
        %p140 = pneg %p56
        %p141 = pneg %p53
        %p142 = pneg %p82
        %p143 = pneg %p79
        %s144 = smul.u32 8, %s14
        %p145 = scmp.lt.s32.totalorder %s144, 31
        %s146 = scalar_select %p145, %s144, 31
        %s147 = smul.addr %s146, 8
        %s148 = scalar_lea.vmem %s2, %s147
        %s149 = smul.u32 8, %s14
        %p150 = scmp.lt.s32.totalorder %s149, 31
        %s151 = scalar_select %p150, %s149, 31
        %s152 = smul.addr %s151, 8
        %s153 = scalar_lea.vmem %s1, %s152
        %s154 = smul.u32 8, %s14
        %s155 = smul.u32 8, %s14
        %p156 = scmp.lt.s32.totalorder %s155, 31
        %s157 = scalar_select %p156, %s155, 31
        %s158 = smul.addr %s157, 8
        %s159 = scalar_lea.vmem %s2, %s158
        %s160 = smul.u32 8, %s14
        %s161 = sld [smem:[#allocation2]]
        %s162 = sld [smem:[#allocation2 + $0x1]]
        %s163 = sld [smem:[#allocation2 + $0x2]]
        %s164 = sld [smem:[#allocation2 + $0x3]]
        %s165 = sld [smem:[#allocation2 + $0x4]]
        %v166 = vld [vmem:[%s153] sm:$0xff]
        %v167 = vld [vmem:[%s153 + $0x8] sm:$0xff]
        %v168 = vld [vmem:[%s153 + $0x10] sm:$0xff]
        %v169 = vld [vmem:[%s153 + $0x18] sm:$0xff]
        %v170 = vld [vmem:[%s153 + $0x20] sm:$0xff]
        %v171 = vld [vmem:[%s153 + $0x28] sm:$0xff]
        %v172 = vld [vmem:[%s153 + $0x30] sm:$0xff]
        %v173 = vld [vmem:[%s153 + $0x38] sm:$0xff]
        %174 = vrot.lane.b32.xlu0 %v166, 127
        %v175 = vpop.permute.xlu0 %174
        %176 = vrot.lane.b32.xlu0 %v167, 127
        %v177 = vpop.permute.xlu0 %176
        %178 = vrot.lane.b32.xlu0 %v168, 127
        %v179 = vpop.permute.xlu0 %178
        %180 = vrot.lane.b32.xlu0 %v169, 127
        %v181 = vpop.permute.xlu0 %180
        %182 = vrot.lane.b32.xlu0 %v170, 127
        %v183 = vpop.permute.xlu0 %182
        %184 = vrot.lane.b32.xlu0 %v171, 127
        %v185 = vpop.permute.xlu0 %184
        %186 = vrot.lane.b32.xlu0 %v172, 127
        %v187 = vpop.permute.xlu0 %186
        %188 = vrot.lane.b32.xlu0 %v173, 127
        %v189 = vpop.permute.xlu0 %188
        %190 = vrot.lane.b32.xlu0 %v166, 112
        %v191 = vpop.permute.xlu0 %190
        %192 = vrot.lane.b32.xlu0 %v167, 112
        %v193 = vpop.permute.xlu0 %192
        %194 = vrot.lane.b32.xlu0 %v168, 112
        %v195 = vpop.permute.xlu0 %194
        %196 = vrot.lane.b32.xlu0 %v169, 112
        %v197 = vpop.permute.xlu0 %196
        %198 = vrot.lane.b32.xlu0 %v170, 112
        %v199 = vpop.permute.xlu0 %198
        %200 = vrot.lane.b32.xlu0 %v171, 112
        %v201 = vpop.permute.xlu0 %200
        %202 = vrot.lane.b32.xlu0 %v172, 112
        %v203 = vpop.permute.xlu0 %202
        %204 = vrot.lane.b32.xlu0 %v173, 112
        %v205 = vpop.permute.xlu0 %204
        %206 = vrot.lane.b32.xlu0 %v166, 111
        %v207 = vpop.permute.xlu0 %206
        %208 = vrot.lane.b32.xlu0 %v167, 111
        %v209 = vpop.permute.xlu0 %208
        %210 = vrot.lane.b32.xlu0 %v168, 111
        %v211 = vpop.permute.xlu0 %210
        %212 = vrot.lane.b32.xlu0 %v169, 111
        %v213 = vpop.permute.xlu0 %212
        %214 = vrot.lane.b32.xlu0 %v170, 111
        %v215 = vpop.permute.xlu0 %214
        %216 = vrot.lane.b32.xlu0 %v171, 111
        %v217 = vpop.permute.xlu0 %216
        %218 = vrot.lane.b32.xlu0 %v172, 111
        %v219 = vpop.permute.xlu0 %218
        %220 = vrot.lane.b32.xlu0 %v173, 111
        %v221 = vpop.permute.xlu0 %220
        %v222 = vstv %s161
        %v223 = vmul.f32 %v222, %v166
        %v224 = vmul.f32 %v222, %v167
        %v225 = vmul.f32 %v222, %v168
        %v226 = vmul.f32 %v222, %v169
        %v227 = vmul.f32 %v222, %v170
        %v228 = vmul.f32 %v222, %v171
        %v229 = vmul.f32 %v222, %v172
        %v230 = vmul.f32 %v222, %v173
        %v231 = vstv %s162
        %v232 = vmul.f32 %v231, %v175
        %v233 = vmul.f32 %v231, %v177
        %v234 = vmul.f32 %v231, %v179
        %v235 = vmul.f32 %v231, %v181
        %v236 = vmul.f32 %v231, %v183
        %v237 = vmul.f32 %v231, %v185
        %v238 = vmul.f32 %v231, %v187
        %v239 = vmul.f32 %v231, %v189
        %v240 = vadd.f32 %v223, %v232
        %v241 = vadd.f32 %v224, %v233
        %v242 = vadd.f32 %v225, %v234
        %v243 = vadd.f32 %v226, %v235
        %v244 = vadd.f32 %v227, %v236
        %v245 = vadd.f32 %v228, %v237
        %v246 = vadd.f32 %v229, %v238
        %v247 = vadd.f32 %v230, %v239
        %v248 = vstv %s163
        %v249 = vmul.f32 %v248, %v191
        %v250 = vmul.f32 %v248, %v193
        %v251 = vmul.f32 %v248, %v195
        %v252 = vmul.f32 %v248, %v197
        %v253 = vmul.f32 %v248, %v199
        %v254 = vmul.f32 %v248, %v201
        %v255 = vmul.f32 %v248, %v203
        %v256 = vmul.f32 %v248, %v205
        %v257 = vadd.f32 %v240, %v249
        %v258 = vadd.f32 %v241, %v250
        %v259 = vadd.f32 %v242, %v251
        %v260 = vadd.f32 %v243, %v252
        %v261 = vadd.f32 %v244, %v253
        %v262 = vadd.f32 %v245, %v254
        %v263 = vadd.f32 %v246, %v255
        %v264 = vadd.f32 %v247, %v256
        %v265 = vstv %s164
        %v266 = vmul.f32 %v265, %v207
        %v267 = vmul.f32 %v265, %v209
        %v268 = vmul.f32 %v265, %v211
        %v269 = vmul.f32 %v265, %v213
        %v270 = vmul.f32 %v265, %v215
        %v271 = vmul.f32 %v265, %v217
        %v272 = vmul.f32 %v265, %v219
        %v273 = vmul.f32 %v265, %v221
        %v274 = vadd.f32 %v257, %v266
        %v275 = vadd.f32 %v258, %v267
        %v276 = vadd.f32 %v259, %v268
        %v277 = vadd.f32 %v260, %v269
        %v278 = vadd.f32 %v261, %v270
        %v279 = vadd.f32 %v262, %v271
        %v280 = vadd.f32 %v263, %v272
        %v281 = vadd.f32 %v264, %v273
        %v282 = vstv %s165
        %v283 = vadd.f32 %v274, %v282
        %v284 = vadd.f32 %v275, %v282
        %v285 = vadd.f32 %v276, %v282
        %v286 = vadd.f32 %v277, %v282
        %v287 = vadd.f32 %v278, %v282
        %v288 = vadd.f32 %v279, %v282
        %v289 = vadd.f32 %v280, %v282
        %v290 = vadd.f32 %v281, %v282
        %v291 = vlaneseq
        %v292 = vand.u32 %v291, 127
        %vm293 = vcmp.lt.s32.totalorder %v292, 15
        %v294 = vsel %vm293, %v283, 0.0
        %v295 = vsel %vm293, %v284, 0.0
        %v296 = vsel %vm293, %v285, 0.0
        %v297 = vsel %vm293, %v286, 0.0
        %v298 = vsel %vm293, %v287, 0.0
        %v299 = vsel %vm293, %v288, 0.0
        %v300 = vsel %vm293, %v289, 0.0
        %v301 = vsel %vm293, %v290, 0.0
        %vm302 = vcmp.ge.s32.totalorder %v292, 16
        %vm303 = vcmp.lt.s32.totalorder %v292, 31
        %vm304 = vmand %vm302, %vm303
        %v305 = vsel %vm304, %v283, 0.0
        %v306 = vsel %vm304, %v284, 0.0
        %v307 = vsel %vm304, %v285, 0.0
        %v308 = vsel %vm304, %v286, 0.0
        %v309 = vsel %vm304, %v287, 0.0
        %v310 = vsel %vm304, %v288, 0.0
        %v311 = vsel %vm304, %v289, 0.0
        %v312 = vsel %vm304, %v290, 0.0
        %313 = vrot.lane.b32.xlu0 %v305, 127
        %v314 = vpop.permute.xlu0 %313
        %315 = vrot.lane.b32.xlu0 %v306, 127
        %v316 = vpop.permute.xlu0 %315
        %317 = vrot.lane.b32.xlu0 %v307, 127
        %v318 = vpop.permute.xlu0 %317
        %319 = vrot.lane.b32.xlu0 %v308, 127
        %v320 = vpop.permute.xlu0 %319
        %321 = vrot.lane.b32.xlu0 %v309, 127
        %v322 = vpop.permute.xlu0 %321
        %323 = vrot.lane.b32.xlu0 %v310, 127
        %v324 = vpop.permute.xlu0 %323
        %325 = vrot.lane.b32.xlu0 %v311, 127
        %v326 = vpop.permute.xlu0 %325
        %327 = vrot.lane.b32.xlu0 %v312, 127
        %v328 = vpop.permute.xlu0 %327
        %v329 = vadd.f32 %v294, %v314
        %v330 = vadd.f32 %v295, %v316
        %v331 = vadd.f32 %v296, %v318
        %v332 = vadd.f32 %v297, %v320
        %v333 = vadd.f32 %v298, %v322
        %v334 = vadd.f32 %v299, %v324
        %v335 = vadd.f32 %v300, %v326
        %v336 = vadd.f32 %v301, %v328
        %vm337 = vcmp.ge.s32.totalorder %v292, 32
        %vm338 = vcmp.lt.s32.totalorder %v292, 47
        %vm339 = vmand %vm337, %vm338
        %v340 = vsel %vm339, %v283, 0.0
        %v341 = vsel %vm339, %v284, 0.0
        %v342 = vsel %vm339, %v285, 0.0
        %v343 = vsel %vm339, %v286, 0.0
        %v344 = vsel %vm339, %v287, 0.0
        %v345 = vsel %vm339, %v288, 0.0
        %v346 = vsel %vm339, %v289, 0.0
        %v347 = vsel %vm339, %v290, 0.0
        %348 = vrot.lane.b32.xlu0 %v340, 126
        %v349 = vpop.permute.xlu0 %348
        %350 = vrot.lane.b32.xlu0 %v341, 126
        %v351 = vpop.permute.xlu0 %350
        %352 = vrot.lane.b32.xlu0 %v342, 126
        %v353 = vpop.permute.xlu0 %352
        %354 = vrot.lane.b32.xlu0 %v343, 126
        %v355 = vpop.permute.xlu0 %354
        %356 = vrot.lane.b32.xlu0 %v344, 126
        %v357 = vpop.permute.xlu0 %356
        %358 = vrot.lane.b32.xlu0 %v345, 126
        %v359 = vpop.permute.xlu0 %358
        %360 = vrot.lane.b32.xlu0 %v346, 126
        %v361 = vpop.permute.xlu0 %360
        %362 = vrot.lane.b32.xlu0 %v347, 126
        %v363 = vpop.permute.xlu0 %362
        %v364 = vadd.f32 %v329, %v349
        %v365 = vadd.f32 %v330, %v351
        %v366 = vadd.f32 %v331, %v353
        %v367 = vadd.f32 %v332, %v355
        %v368 = vadd.f32 %v333, %v357
        %v369 = vadd.f32 %v334, %v359
        %v370 = vadd.f32 %v335, %v361
        %v371 = vadd.f32 %v336, %v363
        %vm372 = vcmp.ge.s32.totalorder %v292, 48
        %vm373 = vcmp.lt.s32.totalorder %v292, 63
        %vm374 = vmand %vm372, %vm373
        %v375 = vsel %vm374, %v283, 0.0
        %v376 = vsel %vm374, %v284, 0.0
        %v377 = vsel %vm374, %v285, 0.0
        %v378 = vsel %vm374, %v286, 0.0
        %v379 = vsel %vm374, %v287, 0.0
        %v380 = vsel %vm374, %v288, 0.0
        %v381 = vsel %vm374, %v289, 0.0
        %v382 = vsel %vm374, %v290, 0.0
        %383 = vrot.lane.b32.xlu0 %v375, 125
        %v384 = vpop.permute.xlu0 %383
        %385 = vrot.lane.b32.xlu0 %v376, 125
        %v386 = vpop.permute.xlu0 %385
        %387 = vrot.lane.b32.xlu0 %v377, 125
        %v388 = vpop.permute.xlu0 %387
        %389 = vrot.lane.b32.xlu0 %v378, 125
        %v390 = vpop.permute.xlu0 %389
        %391 = vrot.lane.b32.xlu0 %v379, 125
        %v392 = vpop.permute.xlu0 %391
        %393 = vrot.lane.b32.xlu0 %v380, 125
        %v394 = vpop.permute.xlu0 %393
        %395 = vrot.lane.b32.xlu0 %v381, 125
        %v396 = vpop.permute.xlu0 %395
        %397 = vrot.lane.b32.xlu0 %v382, 125
        %v398 = vpop.permute.xlu0 %397
        %v399 = vadd.f32 %v364, %v384
        %v400 = vadd.f32 %v365, %v386
        %v401 = vadd.f32 %v366, %v388
        %v402 = vadd.f32 %v367, %v390
        %v403 = vadd.f32 %v368, %v392
        %v404 = vadd.f32 %v369, %v394
        %v405 = vadd.f32 %v370, %v396
        %v406 = vadd.f32 %v371, %v398
        %vm407 = vcmp.ge.s32.totalorder %v292, 64
        %vm408 = vcmp.lt.s32.totalorder %v292, 79
        %vm409 = vmand %vm407, %vm408
        %v410 = vsel %vm409, %v283, 0.0
        %v411 = vsel %vm409, %v284, 0.0
        %v412 = vsel %vm409, %v285, 0.0
        %v413 = vsel %vm409, %v286, 0.0
        %v414 = vsel %vm409, %v287, 0.0
        %v415 = vsel %vm409, %v288, 0.0
        %v416 = vsel %vm409, %v289, 0.0
        %v417 = vsel %vm409, %v290, 0.0
        %418 = vrot.lane.b32.xlu0 %v410, 124
        %v419 = vpop.permute.xlu0 %418
        %420 = vrot.lane.b32.xlu0 %v411, 124
        %v421 = vpop.permute.xlu0 %420
        %422 = vrot.lane.b32.xlu0 %v412, 124
        %v423 = vpop.permute.xlu0 %422
        %424 = vrot.lane.b32.xlu0 %v413, 124
        %v425 = vpop.permute.xlu0 %424
        %426 = vrot.lane.b32.xlu0 %v414, 124
        %v427 = vpop.permute.xlu0 %426
        %428 = vrot.lane.b32.xlu0 %v415, 124
        %v429 = vpop.permute.xlu0 %428
        %430 = vrot.lane.b32.xlu0 %v416, 124
        %v431 = vpop.permute.xlu0 %430
        %432 = vrot.lane.b32.xlu0 %v417, 124
        %v433 = vpop.permute.xlu0 %432
        %v434 = vadd.f32 %v399, %v419
        %v435 = vadd.f32 %v400, %v421
        %v436 = vadd.f32 %v401, %v423
        %v437 = vadd.f32 %v402, %v425
        %v438 = vadd.f32 %v403, %v427
        %v439 = vadd.f32 %v404, %v429
        %v440 = vadd.f32 %v405, %v431
        %v441 = vadd.f32 %v406, %v433
        %vm442 = vcmp.ge.s32.totalorder %v292, 80
        %vm443 = vcmp.lt.s32.totalorder %v292, 95
        %vm444 = vmand %vm442, %vm443
        %v445 = vsel %vm444, %v283, 0.0
        %v446 = vsel %vm444, %v284, 0.0
        %v447 = vsel %vm444, %v285, 0.0
        %v448 = vsel %vm444, %v286, 0.0
        %v449 = vsel %vm444, %v287, 0.0
        %v450 = vsel %vm444, %v288, 0.0
        %v451 = vsel %vm444, %v289, 0.0
        %v452 = vsel %vm444, %v290, 0.0
        %453 = vrot.lane.b32.xlu0 %v445, 123
        %v454 = vpop.permute.xlu0 %453
        %455 = vrot.lane.b32.xlu0 %v446, 123
        %v456 = vpop.permute.xlu0 %455
        %457 = vrot.lane.b32.xlu0 %v447, 123
        %v458 = vpop.permute.xlu0 %457
        %459 = vrot.lane.b32.xlu0 %v448, 123
        %v460 = vpop.permute.xlu0 %459
        %461 = vrot.lane.b32.xlu0 %v449, 123
        %v462 = vpop.permute.xlu0 %461
        %463 = vrot.lane.b32.xlu0 %v450, 123
        %v464 = vpop.permute.xlu0 %463
        %465 = vrot.lane.b32.xlu0 %v451, 123
        %v466 = vpop.permute.xlu0 %465
        %467 = vrot.lane.b32.xlu0 %v452, 123
        %v468 = vpop.permute.xlu0 %467
        %v469 = vadd.f32 %v434, %v454
        %v470 = vadd.f32 %v435, %v456
        %v471 = vadd.f32 %v436, %v458
        %v472 = vadd.f32 %v437, %v460
        %v473 = vadd.f32 %v438, %v462
        %v474 = vadd.f32 %v439, %v464
        %v475 = vadd.f32 %v440, %v466
        %v476 = vadd.f32 %v441, %v468
        %vm477 = vcmp.ge.s32.totalorder %v292, 96
        %vm478 = vcmp.lt.s32.totalorder %v292, 111
        %vm479 = vmand %vm477, %vm478
        %v480 = vsel %vm479, %v283, 0.0
        %v481 = vsel %vm479, %v284, 0.0
        %v482 = vsel %vm479, %v285, 0.0
        %v483 = vsel %vm479, %v286, 0.0
        %v484 = vsel %vm479, %v287, 0.0
        %v485 = vsel %vm479, %v288, 0.0
        %v486 = vsel %vm479, %v289, 0.0
        %v487 = vsel %vm479, %v290, 0.0
        %488 = vrot.lane.b32.xlu0 %v480, 122
        %v489 = vpop.permute.xlu0 %488
        %490 = vrot.lane.b32.xlu0 %v481, 122
        %v491 = vpop.permute.xlu0 %490
        %492 = vrot.lane.b32.xlu0 %v482, 122
        %v493 = vpop.permute.xlu0 %492
        %494 = vrot.lane.b32.xlu0 %v483, 122
        %v495 = vpop.permute.xlu0 %494
        %496 = vrot.lane.b32.xlu0 %v484, 122
        %v497 = vpop.permute.xlu0 %496
        %498 = vrot.lane.b32.xlu0 %v485, 122
        %v499 = vpop.permute.xlu0 %498
        %500 = vrot.lane.b32.xlu0 %v486, 122
        %v501 = vpop.permute.xlu0 %500
        %502 = vrot.lane.b32.xlu0 %v487, 122
        %v503 = vpop.permute.xlu0 %502
        %v504 = vadd.f32 %v469, %v489
        %v505 = vadd.f32 %v470, %v491
        %v506 = vadd.f32 %v471, %v493
        %v507 = vadd.f32 %v472, %v495
        %v508 = vadd.f32 %v473, %v497
        %v509 = vadd.f32 %v474, %v499
        %v510 = vadd.f32 %v475, %v501
        %v511 = vadd.f32 %v476, %v503
        %vm512 = vcmask 859136
        %513 = vst.msk [vmem:[%s159] sm:$0xff] %vm512, %v504
        %514 = vst.msk [vmem:[%s159 + $0x8] sm:$0xff] %vm512, %v505
        %515 = vst.msk [vmem:[%s159 + $0x10] sm:$0xff] %vm512, %v506
        %516 = vst.msk [vmem:[%s159 + $0x18] sm:$0xff] %vm512, %v507
        %517 = vst.msk [vmem:[%s159 + $0x20] sm:$0xff] %vm512, %v508
        %518 = vst.msk [vmem:[%s159 + $0x28] sm:$0xff] %vm512, %v509
        %519 = vst.msk [vmem:[%s159 + $0x30] sm:$0xff] %vm512, %v510
        %520 = vst.msk [vmem:[%s159 + $0x38] sm:$0xff] %vm512, %v511
        %s521 = smul.u32 8, %s14
        %p522 = scmp.lt.s32.totalorder %s521, 31
        %s523 = scalar_select %p522, %s521, 31
        %s524 = smul.addr %s523, 8
        %s525 = scalar_lea.vmem %s2, %s524
        // Predicated region
        $region33: #{conv_bn_forward.1} parent=27 // pred_check
          %p526 = pneg %p79
        $region34: #{conv_bn_forward.1} parent=27 // pred_check_branch
          %528 = sbr.rel (%p526) target = $region36
        $region35: #{conv_bn_forward.1} parent=27 // pred_region
          %s529 = smul.u32 8, %s14
        $region36: #{conv_bn_forward.1} parent=27 // pred_fallthru
          _
      $region28: #{conv_bn_forward.1} parent=5 // pred_fallthru
        _
      %p530 = scmp.le.s32.totalorder 2, %s9
      // Predicated region
      $region37: #{conv_bn_forward.1} parent=5 // pred_check
        %p531 = pneg %p530
      $region38: #{conv_bn_forward.1} parent=5 // pred_check_branch
        %533 = sbr.rel (%p531) target = $region40
      $region39: #{conv_bn_forward.1} parent=5 // pred_region
        %s534 = ssub.s32 %s9, 2
        // Predicated region
        $region41: #{conv_bn_forward.1} parent=39 // pred_check
          %p535 = pneg %p85
        $region42: #{conv_bn_forward.1} parent=39 // pred_check_branch
          %537 = sbr.rel (%p535) target = $region44
        $region43: #{conv_bn_forward.1} parent=39 // pred_region
          %s538 = smul.u32 8, %s15
          %p539 = scmp.lt.s32.totalorder %s538, 31
          %s540 = scalar_select %p539, %s538, 31
          %s541 = smul.addr %s540, 8
          %s542 = scalar_lea.vmem %s2, %s541
        $region44: #{conv_bn_forward.1} parent=39 // pred_fallthru
          _
      $region40: #{conv_bn_forward.1} parent=5 // pred_fallthru
        _
    $region6: #{conv_bn_forward.1} parent=1 // loop_footer
      %s13 = sadd.s32 1, %s9
    $region7: #{conv_bn_forward.1} parent=1 // loop_footer_branch
      %8 = sbr.rel target = $region3
    $region8: #{conv_bn_forward.1} parent=1 // loop_exit
      _
    %543 = vsyncpa [#allocation3], 1
    %s544 = scalar_lea.sflag [#allocation3], 1
    %545 = vsyncpa %s544, 1

</llo_original>
